<compile_context>
chip_gen: v6e
topology: v6e:2x2x1
jax: 0.10.0
libtpu: 0.0.40
codegen_flags: <defaults>
</compile_context>

<pallas_src>
import functools

import jax
import jax.numpy as jnp
from jax import lax
from jax.experimental import pallas as pl
from jax.experimental.pallas import tpu as pltpu


def decoder_kernel(
    inp_ref, lens_ref,
    w_att_ref, b_att_ref, v_att_ref, b_v_ref,
    w_dense_ref, b_dense_ref,
    w_heads_ref, b_heads_ref,
    packed_ref,
    *, num_classes,
):
    x = inp_ref[...]                               # (BB, T, D)  bf16 (or f32)
    BB, T, D = x.shape
    C = num_classes

    # ---- attention energies: e = tanh(x @ W_att + b_att) -------------------
    # Collapse (BB, T) into rows so the whole block is one MXU matmul.
    x2 = x.reshape(BB * T, D)
    e = jnp.tanh(
        jnp.dot(x2, w_att_ref[...], preferred_element_type=jnp.float32)
        + b_att_ref[...]                           # (1, A) f32
    )                                              # (BB*T, A) f32

    # ---- attention scores: VPU multiply + lane reduce (no 1-wide MXU pass) --
    # b_v is a scalar added to every position; kept for faithfulness (softmax
    # is shift-invariant so it does not change alpha, but it is nearly free).
    s = jnp.sum(e * v_att_ref[...], axis=-1, keepdims=True) + b_v_ref[...]
    scores = s.reshape(BB, T)                      # BB*T score scalars onto lanes

    # ---- mask padded positions & softmax over T (f32) -----------------------
    lens = lens_ref[...]                           # (BB, 1) int32
    t_ids = lax.broadcasted_iota(jnp.int32, (BB, T), 1)
    scores = jnp.where(t_ids < lens, scores, -1e30)
    m = jnp.max(scores, axis=-1, keepdims=True)
    p = jnp.exp(scores - m)
    alpha = p * pl.reciprocal(jnp.sum(p, axis=-1, keepdims=True))  # (BB, T) f32

    # ---- weighted context: batched MXU matmul, f32 accumulation -------------
    ctx = jnp.einsum(
        "bqt,btd->bqd",
        alpha.astype(x.dtype).reshape(BB, 1, T), x,
        preferred_element_type=jnp.float32,
    ).reshape(BB, D)                               # (BB, D) f32

    # ---- dense + ReLU (dropout = identity in eval) ---------------------------
    h = jnp.maximum(
        jnp.dot(ctx.astype(x.dtype), w_dense_ref[...],
                preferred_element_type=jnp.float32)
        + b_dense_ref[...],
        0.0,
    )                                              # (BB, D) f32

    # ---- fused label + mem heads: one (D, C+1) matmul ------------------------
    heads = (
        jnp.dot(h, w_heads_ref[...], preferred_element_type=jnp.float32)
        + b_heads_ref[...]
    )                                              # (BB, C+1) f32

    # ---- pack [logits | mem | alpha | 0-pad] into the lane-dense output -----
    packed_ref[...] = jnp.zeros(packed_ref.shape, packed_ref.dtype)
    packed_ref[:, 0:C] = heads[:, 0:C]
    packed_ref[:, C:C + 1] = jax.nn.sigmoid(heads[:, C:C + 1])
    packed_ref[:, C + 1:C + 1 + T] = alpha


def _resident(shape):
    """BlockSpec for a weight/bias that stays resident across all grid steps."""
    nd = len(shape)
    return pl.BlockSpec(shape, lambda *_: (0,) * nd)


@functools.partial(jax.jit, static_argnames=("block_b", "compute_dtype"))
def decoder_forward(inp, seq_lengths, params, *, block_b=None,
                    compute_dtype=jnp.bfloat16):
    B, T, D = inp.shape
    A = params["w_att"].shape[1]
    C = params["w_label"].shape[1]

    if block_b is None:
        block_b = B
    assert B % block_b == 0, "block_b must divide the batch"
    assert block_b == B or block_b % 8 == 0, "sub-batch blocks must be 8-aligned"

    # Lane-dense packed output width: smallest multiple of 128 that fits
    # [C logits | 1 mem | T alpha].
    P = max(128, ((C + 1 + T + 127) // 128) * 128)

    cdt = compute_dtype
    x = inp.astype(cdt)                                        # (B, T, D)
    w_att = params["w_att"].astype(cdt)                        # (D, A)
    w_dense = params["w_dense"].astype(cdt)                    # (D, D)
    b_att = params["b_att"].astype(jnp.float32)                # (1, A)
    v_att = params["v_att"].astype(jnp.float32).T              # (1, A) row for VPU reduce
    b_v = params["b_v"].astype(jnp.float32)                    # (1, 1)
    b_dense = params["b_dense"].astype(jnp.float32)            # (1, D)

    # Fuse label + mem heads once, outside the kernel.
    w_heads = jnp.concatenate(
        [params["w_label"], params["w_mem"]], axis=1).astype(jnp.float32)  # (D, C+1)
    b_heads = jnp.concatenate(
        [params["b_label"], params["b_mem"]], axis=1).astype(jnp.float32)  # (1, C+1)

    lens = seq_lengths.reshape(B, 1).astype(jnp.int32)

    kernel = functools.partial(decoder_kernel, num_classes=C)

    packed = pl.pallas_call(
        kernel,
        out_shape=jax.ShapeDtypeStruct((B, P), jnp.float32),
        grid_spec=pltpu.PrefetchScalarGridSpec(
            num_scalar_prefetch=0,
            grid=(B // block_b,),
            in_specs=[
                pl.BlockSpec((block_b, T, D), lambda b: (b, 0, 0)),  # inp
                pl.BlockSpec((block_b, 1), lambda b: (b, 0)),        # seq lengths
                _resident((D, A)),        # w_att
                _resident((1, A)),        # b_att
                _resident((1, A)),        # v_att (row)
                _resident((1, 1)),        # b_v
                _resident((D, D)),        # w_dense
                _resident((1, D)),        # b_dense
                _resident((D, C + 1)),    # fused head weight
                _resident((1, C + 1)),    # fused head bias
            ],
            out_specs=pl.BlockSpec((block_b, P), lambda b: (b, 0)),
        ),
        compiler_params=pltpu.CompilerParams(
            dimension_semantics=("parallel",)),
    )(x, lens, w_att, b_att, v_att, b_v, w_dense, b_dense, w_heads, b_heads)

    out = packed[:, :C]
    out_mem = packed[:, C:C + 1]
    alpha = packed[:, C + 1:C + 1 + T]
    return (out, out_mem), alpha


def decoder_reference(inp, seq_lengths, params):
    """Pure-JAX f32 reference with the same semantics as the PyTorch module."""
    x = inp.astype(jnp.float32)
    B, T, D = x.shape
    e = jnp.tanh(jnp.einsum("btd,da->bta", x, params["w_att"]) + params["b_att"])
    s = jnp.einsum("bta,ao->bto", e, params["v_att"])[..., 0] + params["b_v"][0, 0]
    mask = jnp.arange(T)[None, :] < seq_lengths.reshape(B, 1)
    s = jnp.where(mask, s, -1e30)
    alpha = jax.nn.softmax(s, axis=-1)
    ctx = jnp.einsum("bt,btd->bd", alpha, x)
    h = jax.nn.relu(ctx @ params["w_dense"] + params["b_dense"])
    out = h @ params["w_label"] + params["b_label"]
    out_mem = jax.nn.sigmoid(h @ params["w_mem"] + params["b_mem"])
    return (out, out_mem), alpha


def init_params(key, in_size, att_size, num_classes):
    ks = jax.random.split(key, 8)
    scale = 0.1
    return {
        # attention: Linear(in_size, att_size), Linear(att_size, 1)
        "w_att":   scale * jax.random.normal(ks[0], (in_size, att_size), jnp.float32),
        "b_att":   jnp.zeros((1, att_size), jnp.float32),
        "v_att":   scale * jax.random.normal(ks[1], (att_size, 1), jnp.float32),
        "b_v":     jnp.zeros((1, 1), jnp.float32),
        # dense: Linear(in_size, in_size)
        "w_dense": scale * jax.random.normal(ks[2], (in_size, in_size), jnp.float32),
        "b_dense": scale * jax.random.normal(ks[3], (1, in_size), jnp.float32),
        # label: Linear(in_size, num_classes)
        "w_label": scale * jax.random.normal(ks[4], (in_size, num_classes), jnp.float32),
        "b_label": scale * jax.random.normal(ks[5], (1, num_classes), jnp.float32),
        # mem: Linear(in_size, 1)
        "w_mem":   scale * jax.random.normal(ks[6], (in_size, 1), jnp.float32),
        "b_mem":   scale * jax.random.normal(ks[7], (1, 1), jnp.float32),
    }


if __name__ == "__main__":
    # small shapes consistent with the module's forward:
    B, T, D = 2, 8, 32          # batch, seq_len, in_size
    ATT, C = 16, 10             # args.att_size, args.num_classes

    key = jax.random.PRNGKey(0)
    k_inp, k_par = jax.random.split(key)

    inp = jax.random.normal(k_inp, (B, T, D), jnp.float32)
    seq_lengths = jnp.array([8, 5], dtype=jnp.int32)   # second sequence is padded

    params = init_params(k_par, D, ATT, C)

    (out, out_mem), alpha = decoder_forward(inp, seq_lengths, params)
    jax.block_until_ready((out, out_mem, alpha))

    assert out.shape == (B, C)
    assert out_mem.shape == (B, 1)
    assert alpha.shape == (B, T)
    # padded positions of the second sequence must get ~zero attention weight
    assert float(jnp.max(alpha[1, 5:])) < 1e-6
    # attention weights sum to ~1 per row
    assert float(jnp.max(jnp.abs(jnp.sum(alpha, axis=-1) - 1.0))) < 1e-3

    # compare against the pure-JAX f32 reference (kernel matmuls run in bf16)
    (ref_out, ref_mem), ref_alpha = decoder_reference(inp, seq_lengths, params)
    assert bool(jnp.allclose(out, ref_out, atol=5e-2, rtol=5e-2))
    assert bool(jnp.allclose(out_mem, ref_mem, atol=5e-2, rtol=5e-2))
    assert bool(jnp.allclose(alpha, ref_alpha, atol=5e-2, rtol=5e-2))

    print("KERNEL_OK")
</pallas_src>

<mosaic_0001>
module attributes {stable_mosaic.version = 11 : i64} {
  func.func @decoder_kernel(%arg0: i32, %arg1: memref<2x8x32xbf16, #tpu.memory_space<vmem>>, %arg2: memref<2x1xi32, #tpu.memory_space<vmem>>, %arg3: memref<32x16xbf16, #tpu.memory_space<vmem>>, %arg4: memref<1x16xf32, #tpu.memory_space<vmem>>, %arg5: memref<1x16xf32, #tpu.memory_space<vmem>>, %arg6: memref<1x1xf32, #tpu.memory_space<vmem>>, %arg7: memref<32x32xbf16, #tpu.memory_space<vmem>>, %arg8: memref<1x32xf32, #tpu.memory_space<vmem>>, %arg9: memref<32x11xf32, #tpu.memory_space<vmem>>, %arg10: memref<1x11xf32, #tpu.memory_space<vmem>>, %arg11: memref<2x128xf32, #tpu.memory_space<vmem>>) attributes {dimension_semantics = [#tpu.dimension_semantics<parallel>], iteration_bounds = array<i64: 1>, scalar_prefetch = 0 : i64, scratch_operands = 0 : i64, tpu.core_type = #tpu.core_type<tc>, window_params = [{transform_indices = @transform_0, window_bounds = array<i64: 2, 8, 32>}, {transform_indices = @transform_1, window_bounds = array<i64: 2, 1>}, {pipeline_mode = #tpu.pipeline_mode<synchronous>, transform_indices = @transform_2, window_bounds = array<i64: 32, 16>}, {pipeline_mode = #tpu.pipeline_mode<synchronous>, transform_indices = @transform_3, window_bounds = array<i64: 1, 16>}, {pipeline_mode = #tpu.pipeline_mode<synchronous>, transform_indices = @transform_4, window_bounds = array<i64: 1, 16>}, {pipeline_mode = #tpu.pipeline_mode<synchronous>, transform_indices = @transform_5, window_bounds = array<i64: 1, 1>}, {pipeline_mode = #tpu.pipeline_mode<synchronous>, transform_indices = @transform_6, window_bounds = array<i64: 32, 32>}, {pipeline_mode = #tpu.pipeline_mode<synchronous>, transform_indices = @transform_7, window_bounds = array<i64: 1, 32>}, {pipeline_mode = #tpu.pipeline_mode<synchronous>, transform_indices = @transform_8, window_bounds = array<i64: 32, 11>}, {pipeline_mode = #tpu.pipeline_mode<synchronous>, transform_indices = @transform_9, window_bounds = array<i64: 1, 11>}, {transform_indices = @transform_10, window_bounds = array<i64: 2, 128>}]} {
    %c0 = arith.constant 0 : index
    %c0_0 = arith.constant 0 : index
    %c0_1 = arith.constant 0 : index
    %0 = vector.load %arg1[%c0, %c0_0, %c0_1] : memref<2x8x32xbf16, #tpu.memory_space<vmem>>, vector<2x8x32xbf16>
    %1 = vector.shape_cast %0 : vector<2x8x32xbf16> to vector<16x32xbf16>
    %c0_2 = arith.constant 0 : index
    %c0_3 = arith.constant 0 : index
    %2 = vector.load %arg3[%c0_2, %c0_3] : memref<32x16xbf16, #tpu.memory_space<vmem>>, vector<32x16xbf16>
    %cst = arith.constant dense<0.000000e+00> : vector<16x16xf32>
    %3 = tpu.matmul %1, %2, %cst {dimension_numbers = #tpu.dot_dimension_numbers<[1], [0], [0], [1], [0, 0, 1, 1], [], []>} : vector<16x32xbf16>, vector<32x16xbf16>, vector<16x16xf32> -> vector<16x16xf32>
    %c0_4 = arith.constant 0 : index
    %c0_5 = arith.constant 0 : index
    %4 = vector.load %arg4[%c0_4, %c0_5] : memref<1x16xf32, #tpu.memory_space<vmem>>, vector<1x16xf32>
    %5 = vector.broadcast %4 : vector<1x16xf32> to vector<16x16xf32>
    %6 = arith.addf %3, %5 : vector<16x16xf32>
    %7 = math.tanh %6 : vector<16x16xf32>
    %c0_6 = arith.constant 0 : index
    %c0_7 = arith.constant 0 : index
    %8 = vector.load %arg5[%c0_6, %c0_7] : memref<1x16xf32, #tpu.memory_space<vmem>>, vector<1x16xf32>
    %9 = vector.broadcast %8 : vector<1x16xf32> to vector<16x16xf32>
    %10 = arith.mulf %7, %9 : vector<16x16xf32>
    %cst_8 = arith.constant dense<0.000000e+00> : vector<16xf32>
    %11 = vector.multi_reduction <add>, %10, %cst_8 [1] : vector<16x16xf32> to vector<16xf32>
    %12 = vector.shape_cast %11 : vector<16xf32> to vector<16x1xf32>
    %c0_9 = arith.constant 0 : index
    %c0_10 = arith.constant 0 : index
    %13 = vector.load %arg6[%c0_9, %c0_10] : memref<1x1xf32, #tpu.memory_space<vmem>>, vector<1x1xf32>
    %14 = vector.broadcast %13 : vector<1x1xf32> to vector<16x1xf32>
    %15 = arith.addf %12, %14 : vector<16x1xf32>
    %16 = vector.shape_cast %15 : vector<16x1xf32> to vector<2x8xf32>
    %c0_11 = arith.constant 0 : index
    %c0_12 = arith.constant 0 : index
    %17 = vector.load %arg2[%c0_11, %c0_12] : memref<2x1xi32, #tpu.memory_space<vmem>>, vector<2x1xi32>
    %18 = tpu.iota {dimensions = array<i32: 1>} : vector<2x8xi32>
    %19 = vector.broadcast %17 : vector<2x1xi32> to vector<2x8xi32>
    %20 = arith.cmpi slt, %18, %19 : vector<2x8xi32>
    %cst_13 = arith.constant -1.000000e+30 : f32
    %21 = vector.broadcast %cst_13 : f32 to vector<2x8xf32>
    %22 = arith.select %20, %16, %21 : vector<2x8xi1>, vector<2x8xf32>
    %cst_14 = arith.constant dense<0xFF800000> : vector<2xf32>
    %23 = vector.multi_reduction <maximumf>, %22, %cst_14 [1] : vector<2x8xf32> to vector<2xf32>
    %24 = vector.shape_cast %23 : vector<2xf32> to vector<2x1xf32>
    %25 = vector.broadcast %24 : vector<2x1xf32> to vector<2x8xf32>
    %26 = arith.subf %22, %25 : vector<2x8xf32>
    %27 = math.exp %26 : vector<2x8xf32>
    %cst_15 = arith.constant dense<0.000000e+00> : vector<2xf32>
    %28 = vector.multi_reduction <add>, %27, %cst_15 [1] : vector<2x8xf32> to vector<2xf32>
    %29 = vector.shape_cast %28 : vector<2xf32> to vector<2x1xf32>
    %30 = tpu.reciprocal %29 : vector<2x1xf32> -> vector<2x1xf32>
    %31 = vector.broadcast %30 : vector<2x1xf32> to vector<2x8xf32>
    %32 = arith.mulf %27, %31 : vector<2x8xf32>
    %33 = arith.truncf %32 : vector<2x8xf32> to vector<2x8xbf16>
    %34 = vector.shape_cast %33 : vector<2x8xbf16> to vector<2x1x8xbf16>
    "tpu.trace_start"() <{level = 10 : i32, message = "bqt,btd->bqd"}> : () -> ()
    %cst_16 = arith.constant dense<0.000000e+00> : vector<2x1x32xf32>
    %35 = tpu.matmul %34, %0, %cst_16 {dimension_numbers = #tpu.dot_dimension_numbers<[2], [1], [1], [2], [0, 0, 0, 1, 1, 2], [0], [0]>} : vector<2x1x8xbf16>, vector<2x8x32xbf16>, vector<2x1x32xf32> -> vector<2x1x32xf32>
    "tpu.trace_stop"() : () -> ()
    %36 = vector.shape_cast %35 : vector<2x1x32xf32> to vector<2x32xf32>
    %37 = arith.truncf %36 : vector<2x32xf32> to vector<2x32xbf16>
    %c0_17 = arith.constant 0 : index
    %c0_18 = arith.constant 0 : index
    %38 = vector.load %arg7[%c0_17, %c0_18] : memref<32x32xbf16, #tpu.memory_space<vmem>>, vector<32x32xbf16>
    %cst_19 = arith.constant dense<0.000000e+00> : vector<2x32xf32>
    %39 = tpu.matmul %37, %38, %cst_19 {dimension_numbers = #tpu.dot_dimension_numbers<[1], [0], [0], [1], [0, 0, 1, 1], [], []>} : vector<2x32xbf16>, vector<32x32xbf16>, vector<2x32xf32> -> vector<2x32xf32>
    %c0_20 = arith.constant 0 : index
    %c0_21 = arith.constant 0 : index
    %40 = vector.load %arg8[%c0_20, %c0_21] : memref<1x32xf32, #tpu.memory_space<vmem>>, vector<1x32xf32>
    %41 = vector.broadcast %40 : vector<1x32xf32> to vector<2x32xf32>
    %42 = arith.addf %39, %41 : vector<2x32xf32>
    %cst_22 = arith.constant 0.000000e+00 : f32
    %43 = vector.broadcast %cst_22 : f32 to vector<2x32xf32>
    %44 = arith.maximumf %42, %43 : vector<2x32xf32>
    %c0_23 = arith.constant 0 : index
    %c0_24 = arith.constant 0 : index
    %45 = vector.load %arg9[%c0_23, %c0_24] : memref<32x11xf32, #tpu.memory_space<vmem>>, vector<32x11xf32>
    %cst_25 = arith.constant dense<0.000000e+00> : vector<2x11xf32>
    %46 = tpu.matmul %44, %45, %cst_25 {dimension_numbers = #tpu.dot_dimension_numbers<[1], [0], [0], [1], [0, 0, 1, 1], [], []>} : vector<2x32xf32>, vector<32x11xf32>, vector<2x11xf32> -> vector<2x11xf32>
    %c0_26 = arith.constant 0 : index
    %c0_27 = arith.constant 0 : index
    %47 = vector.load %arg10[%c0_26, %c0_27] : memref<1x11xf32, #tpu.memory_space<vmem>>, vector<1x11xf32>
    %48 = vector.broadcast %47 : vector<1x11xf32> to vector<2x11xf32>
    %49 = arith.addf %46, %48 : vector<2x11xf32>
    %cst_28 = arith.constant 0.000000e+00 : f32
    %50 = vector.broadcast %cst_28 : f32 to vector<2x128xf32>
    %c0_29 = arith.constant 0 : index
    %c0_30 = arith.constant 0 : index
    %51 = vector.load %arg11[%c0_29, %c0_30] : memref<2x128xf32, #tpu.memory_space<vmem>>, vector<2x128xf32>
    tpu.vector_store %arg11[%c0_29, %c0_30], %50 {strides = array<i32>} : memref<2x128xf32, #tpu.memory_space<vmem>>, vector<2x128xf32>,
    %52 = vector.extract_strided_slice %49 {offsets = [0, 0], sizes = [2, 10], strides = [1, 1]} : vector<2x11xf32> to vector<2x10xf32>
    %c0_31 = arith.constant 0 : index
    %c0_32 = arith.constant 0 : index
    %53 = vector.load %arg11[%c0_31, %c0_32] : memref<2x128xf32, #tpu.memory_space<vmem>>, vector<2x10xf32>
    tpu.vector_store %arg11[%c0_31, %c0_32], %52 {strides = array<i32>} : memref<2x128xf32, #tpu.memory_space<vmem>>, vector<2x10xf32>,
    %54 = vector.extract_strided_slice %49 {offsets = [0, 10], sizes = [2, 1], strides = [1, 1]} : vector<2x11xf32> to vector<2x1xf32>
    %55 = arith.negf %54 : vector<2x1xf32>
    %56 = math.exp %55 : vector<2x1xf32>
    %cst_33 = arith.constant 1.000000e+00 : f32
    %57 = vector.broadcast %cst_33 : f32 to vector<2x1xf32>
    %58 = arith.addf %57, %56 : vector<2x1xf32>
    %59 = arith.divf %57, %58 : vector<2x1xf32>
    %c0_34 = arith.constant 0 : index
    %c10 = arith.constant 10 : index
    %60 = vector.load %arg11[%c0_34, %c10] : memref<2x128xf32, #tpu.memory_space<vmem>>, vector<2x1xf32>
    tpu.vector_store %arg11[%c0_34, %c10], %59 {strides = array<i32>} : memref<2x128xf32, #tpu.memory_space<vmem>>, vector<2x1xf32>,
    %c0_35 = arith.constant 0 : index
    %c11 = arith.constant 11 : index
    %61 = vector.load %arg11[%c0_35, %c11] : memref<2x128xf32, #tpu.memory_space<vmem>>, vector<2x8xf32>
    tpu.vector_store %arg11[%c0_35, %c11], %32 {strides = array<i32>} : memref<2x128xf32, #tpu.memory_space<vmem>>, vector<2x8xf32>,
    return
  }
  func.func @transform_0(%arg0: i32) -> (i32, i32, i32) {
    %c0_i32 = arith.constant 0 : i32
    %c0_i32_0 = arith.constant 0 : i32
    %c0_i32_1 = arith.constant 0 : i32
    return %arg0, %c0_i32, %c0_i32_0 : i32, i32, i32
  }
  func.func @transform_1(%arg0: i32) -> (i32, i32) {
    %c0_i32 = arith.constant 0 : i32
    %c0_i32_0 = arith.constant 0 : i32
    return %arg0, %c0_i32 : i32, i32
  }
  func.func @transform_2(%arg0: i32) -> (i32, i32) {
    %c0_i32 = arith.constant 0 : i32
    %c0_i32_0 = arith.constant 0 : i32
    %c0_i32_1 = arith.constant 0 : i32
    return %c0_i32, %c0_i32_0 : i32, i32
  }
  func.func @transform_3(%arg0: i32) -> (i32, i32) {
    %c0_i32 = arith.constant 0 : i32
    %c0_i32_0 = arith.constant 0 : i32
    %c0_i32_1 = arith.constant 0 : i32
    return %c0_i32, %c0_i32_0 : i32, i32
  }
  func.func @transform_4(%arg0: i32) -> (i32, i32) {
    %c0_i32 = arith.constant 0 : i32
    %c0_i32_0 = arith.constant 0 : i32
    %c0_i32_1 = arith.constant 0 : i32
    return %c0_i32, %c0_i32_0 : i32, i32
  }
  func.func @transform_5(%arg0: i32) -> (i32, i32) {
    %c0_i32 = arith.constant 0 : i32
    %c0_i32_0 = arith.constant 0 : i32
    %c0_i32_1 = arith.constant 0 : i32
    return %c0_i32, %c0_i32_0 : i32, i32
  }
  func.func @transform_6(%arg0: i32) -> (i32, i32) {
    %c0_i32 = arith.constant 0 : i32
    %c0_i32_0 = arith.constant 0 : i32
    %c0_i32_1 = arith.constant 0 : i32
    return %c0_i32, %c0_i32_0 : i32, i32
  }
  func.func @transform_7(%arg0: i32) -> (i32, i32) {
    %c0_i32 = arith.constant 0 : i32
    %c0_i32_0 = arith.constant 0 : i32
    %c0_i32_1 = arith.constant 0 : i32
    return %c0_i32, %c0_i32_0 : i32, i32
  }
  func.func @transform_8(%arg0: i32) -> (i32, i32) {
    %c0_i32 = arith.constant 0 : i32
    %c0_i32_0 = arith.constant 0 : i32
    %c0_i32_1 = arith.constant 0 : i32
    return %c0_i32, %c0_i32_0 : i32, i32
  }
  func.func @transform_9(%arg0: i32) -> (i32, i32) {
    %c0_i32 = arith.constant 0 : i32
    %c0_i32_0 = arith.constant 0 : i32
    %c0_i32_1 = arith.constant 0 : i32
    return %c0_i32, %c0_i32_0 : i32, i32
  }
  func.func @transform_10(%arg0: i32) -> (i32, i32) {
    %c0_i32 = arith.constant 0 : i32
    %c0_i32_0 = arith.constant 0 : i32
    return %arg0, %c0_i32 : i32, i32
  }
}

</mosaic_0001>

<llo_original>
// kernel: decoder_forward.1
$region0: #{decoder_forward.1}
  #allocation0 [shape = 'u32[]', space=smem, size = 0x4, offset = 0x4, fixed_abs, tag = 'smem constant byte address 0x4 - core index']
  #allocation1 [shape = 'u32[144,128]{1,0:T(1,128)}', space=vmem, size = 0x12000, scoped, tag = 'internal scratch']
  #allocation2 [shape = 'f32[1,1]{1,0:T(1,128)S(1)}', space=vmem, size = 0x200, scoped, tag = 'scoped memory for decoder_forward.1']
  %s0 = inlined_call_operand.vmem [shape: bf16[2,8,32], index: 0, kind: input, shape index: {}]
  %s1 = inlined_call_operand.vmem [shape: s32[2,1], index: 1, kind: input, shape index: {}]
  %s2 = inlined_call_operand.vmem [shape: bf16[32,16], index: 2, kind: input, shape index: {}]
  %s3 = inlined_call_operand.vmem [shape: f32[1,16], index: 3, kind: input, shape index: {}]
  %s4 = inlined_call_operand.vmem [shape: f32[1,16], index: 4, kind: input, shape index: {}]
  %s5 = inlined_call_operand.<no memory space> [shape: f32[1,1], index: 5, kind: input, shape index: {}]
  %s6 = inlined_call_operand.vmem [shape: bf16[32,32], index: 6, kind: input, shape index: {}]
  %s7 = inlined_call_operand.vmem [shape: f32[1,32], index: 7, kind: input, shape index: {}]
  %s8 = inlined_call_operand.vmem [shape: f32[32,11], index: 8, kind: input, shape index: {}]
  %s9 = inlined_call_operand.vmem [shape: f32[1,11], index: 9, kind: input, shape index: {}]
  %s10 = inlined_call_operand.vmem [shape: f32[2,128], index: 10, kind: output, shape index: {}]
  %s11 = sld [smem:[#allocation0]]
  $region50: #{decoder_forward.1} parent=0
    _
  %s13 = ssub.s32 1, %s11
  %s14 = scalar_select 0, %s13, %s11
  %v15 = vstv %s5
  %16 = vst [vmem:[#allocation2] sm:$0x1] %v15
  // Predicated region
  $region2: #{decoder_forward.1} parent=0 // pred_check
    _
  $region3: #{decoder_forward.1} parent=0 // pred_check_branch
    %18 = sbr.rel (0) target = $region5
  $region4: #{decoder_forward.1} parent=0 // pred_region
    _
  $region5: #{decoder_forward.1} parent=0 // pred_fallthru
    _
  // Predicated region
  $region6: #{decoder_forward.1} parent=0 // pred_check
    _
  $region7: #{decoder_forward.1} parent=0 // pred_check_branch
    %20 = sbr.rel (0) target = $region9
  $region8: #{decoder_forward.1} parent=0 // pred_region
    _
  $region9: #{decoder_forward.1} parent=0 // pred_fallthru
    _
  // Predicated region
  $region10: #{decoder_forward.1} parent=0 // pred_check
    _
  $region11: #{decoder_forward.1} parent=0 // pred_check_branch
    %22 = sbr.rel (0) target = $region13
  $region12: #{decoder_forward.1} parent=0 // pred_region
    _
  $region13: #{decoder_forward.1} parent=0 // pred_fallthru
    _
  // Predicated region
  $region14: #{decoder_forward.1} parent=0 // pred_check
    _
  $region15: #{decoder_forward.1} parent=0 // pred_check_branch
    %24 = sbr.rel (0) target = $region17
  $region16: #{decoder_forward.1} parent=0 // pred_region
    _
  $region17: #{decoder_forward.1} parent=0 // pred_fallthru
    _
  // Predicated region
  $region18: #{decoder_forward.1} parent=0 // pred_check
    _
  $region19: #{decoder_forward.1} parent=0 // pred_check_branch
    %26 = sbr.rel (0) target = $region21
  $region20: #{decoder_forward.1} parent=0 // pred_region
    _
  $region21: #{decoder_forward.1} parent=0 // pred_fallthru
    _
  // Predicated region
  $region22: #{decoder_forward.1} parent=0 // pred_check
    _
  $region23: #{decoder_forward.1} parent=0 // pred_check_branch
    %28 = sbr.rel (0) target = $region25
  $region24: #{decoder_forward.1} parent=0 // pred_region
    _
  $region25: #{decoder_forward.1} parent=0 // pred_fallthru
    _
  // Predicated region
  $region26: #{decoder_forward.1} parent=0 // pred_check
    _
  $region27: #{decoder_forward.1} parent=0 // pred_check_branch
    %30 = sbr.rel (0) target = $region29
  $region28: #{decoder_forward.1} parent=0 // pred_region
    _
  $region29: #{decoder_forward.1} parent=0 // pred_fallthru
    _
  // Predicated region
  $region30: #{decoder_forward.1} parent=0 // pred_check
    _
  $region31: #{decoder_forward.1} parent=0 // pred_check_branch
    %32 = sbr.rel (0) target = $region33
  $region32: #{decoder_forward.1} parent=0 // pred_region
    _
  $region33: #{decoder_forward.1} parent=0 // pred_fallthru
    _
  // Predicated region
  $region34: #{decoder_forward.1} parent=0 // pred_check
    _
  $region35: #{decoder_forward.1} parent=0 // pred_check_branch
    %34 = sbr.rel (0) target = $region37
  $region36: #{decoder_forward.1} parent=0 // pred_region
    _
  $region37: #{decoder_forward.1} parent=0 // pred_fallthru
    _
  // Predicated region
  $region38: #{decoder_forward.1} parent=0 // pred_check
    _
  $region39: #{decoder_forward.1} parent=0 // pred_check_branch
    %36 = sbr.rel (0) target = $region41
  $region40: #{decoder_forward.1} parent=0 // pred_region
    _
  $region41: #{decoder_forward.1} parent=0 // pred_fallthru
    _
  %v38 = vld [vmem:[%s0] sm:$0xf]
  %v39 = vld [vmem:[%s0 + $0x4] sm:$0xf]
  %v40 = vld [vmem:[%s2] sm:$0xf]
  %v41 = vld [vmem:[%s2 + $0x4] sm:$0xf]
  %v42 = vld [vmem:[%s2 + $0x8] sm:$0xf]
  %v43 = vld [vmem:[%s2 + $0xc] sm:$0xf]
  %v44 = vld [vmem:[%s3] sm:$0x1]
  %v46 = vlaneseq
  %v47 = vshrl.u32 %v46, 7
  %v48 = vsub.s32 0, %v47
  %v49 = vrot.slane %v44, %v48
  %v53 = vunpack.c.l.b16 %v38
  %v54 = vunpack.c.l.b16 %v39
  %v55 = vpack.c.b16 %v54, %v53
  %v60 = vunpack.c.l.b16 %v40
  %v61 = vunpack.c.l.b16 %v41
  %v62 = vunpack.c.l.b16 %v42
  %v63 = vunpack.c.l.b16 %v43
  %v64 = vpack.c.b16 %v61, %v60
  %v65 = vpack.c.b16 %v63, %v62
  %vm68 = vcmask 261120
  %v70 = vsel %vm68, %v55, 0
  %72 = vmatprep.subr.bf16.mxu0 0
  %73 = vmatpush1.bf16.msra.mxu0 0
  %74 = vmatprep.subr.bf16.mxu0 0
  %75 = vmatpush1.bf16.msra.mxu0 0
  %76 = vmatprep.subr.bf16.mxu0 0
  %77 = vmatpush1.bf16.msra.mxu0 0
  %78 = vmatprep.subr.bf16.mxu0 0
  %79 = vmatpush1.bf16.msra.mxu0 0
  %80 = vmatprep.subr.bf16.mxu0 0
  %81 = vmatpush1.bf16.msra.mxu0 0
  %82 = vmatprep.subr.bf16.mxu0 0
  %83 = vmatpush1.bf16.msra.mxu0 0
  %84 = vmatprep.subr.bf16.mxu0 0
  %85 = vmatpush1.bf16.msra.mxu0 %v65
  %86 = vmatprep.subr.bf16.mxu0 0
  %87 = vmatpush1.bf16.msra.mxu0 %v64
  %88 = vmatprep.subr.bf16.mxu0 0
  %89 = vmatpush2.bf16.msra.mxu0 0
  %90 = vmatprep.subr.bf16.mxu0 0
  %91 = vmatpush2.bf16.msra.mxu0 0
  %92 = vmatprep.subr.bf16.mxu0 0
  %93 = vmatpush2.bf16.msra.mxu0 0
  %94 = vmatprep.subr.bf16.mxu0 0
  %95 = vmatpush2.bf16.msra.mxu0 0
  %96 = vmatprep.subr.bf16.mxu0 0
  %97 = vmatpush2.bf16.msra.mxu0 0
  %98 = vmatprep.subr.bf16.mxu0 0
  %99 = vmatpush2.bf16.msra.mxu0 0
  %100 = vmatprep.subr.bf16.mxu0 0
  %101 = vmatpush2.bf16.msra.mxu0 0
  %102 = vmatprep.subr.bf16.mxu0 0
  %103 = vmatpush2.bf16.msra.mxu0 0
  %104 = vmatprep.mubr.bf16.mxu0 0
  %105 = vmatmul.mubr.bf16.gmra.mxu0 %v70
  %v106 = vpop.f32.mrf.mxu0
  %v107 = vadd.f32 %v49, %v106
  %v108 = vpop.f32.mrf.mxu0
  %v109 = vpop.f32.mrf.mxu0
  %v110 = vadd.f32 %v49, %v109
  %v111 = vpop.f32.mrf.mxu0
  %112 = vdwg.mxu0
  %v113 = vtanh.pop %v107
  %v114 = vtanh.pop %v110
  %v115 = vld [vmem:[%s4] sm:$0x1]
  %v117 = vlaneseq
  %v118 = vshrl.u32 %v117, 7
  %v119 = vsub.s32 0, %v118
  %v120 = vrot.slane %v115, %v119
  %v122 = vmul.f32 %v113, %v120
  %v123 = vmul.f32 %v114, %v120
  %vm124 = vcmask 130048
  %v125 = vsel %vm124, %v122, 0.0
  %126 = vadd.xlane.f32.xlu0 %v125
  %v127 = vpop.xlane.xlu0 %126
  %v128 = vsel %vm124, %v123, 0.0
  %129 = vadd.xlane.f32.xlu0 %v128
  %v130 = vpop.xlane.xlu0 %129
  %v131 = vld [vmem:[#allocation2] sm:$0x1]
  %v133 = vlaneseq
  %v134 = vshrl.u32 %v133, 7
  %v135 = vsub.s32 0, %v134
  %v136 = vrot.slane %v131, %v135
  %v138 = vadd.f32 %v127, %v136
  %v139 = vadd.f32 %v130, %v136
  %v140 = vld [vmem:[%s1] sm:$0x3]
  %v141 = vlaneseq
  %v142 = vand.u32 %v141, 127
  %143 = vset.pattern.permute.xlu0 0
  %144 = vperm.xlu0 %143, %v140
  %v145 = vpop.permute.xlu0 %144
  %vm146 = vcmp.lt.s32.totalorder %v142, %v145
  %149 = vset.pattern.permute.xlu0 0
  %150 = vperm.xlu0 %149, %v138
  %v151 = vpop.permute.xlu0 %150
  %152 = vset.pattern.permute.xlu0 0
  %153 = vperm.xlu0 %152, %v139
  %v154 = vpop.permute.xlu0 %153
  %v155 = vlaneseq
  %v156 = vshrl.u32 %v155, 7
  %v157 = vsub.s32 %v142, %v156
  %v158 = vrot.slane %v151, %v157
  %v159 = vlaneseq
  %v160 = vshrl.u32 %v159, 7
  %v161 = vsub.s32 %v142, %v160
  %v162 = vrot.slane %v154, %v161
  %vm163 = vcmask 1041409
  %v164 = vsel %vm163, %v162, %v158
  %v166 = vsel %vm146, %v164, -1e+30
  %vm167 = vcmask 58368
  %v168 = vsel %vm167, %v166, -inf
  %169 = vmax.xlane.f32.xlu0 %v168
  %v170 = vpop.xlane.xlu0 %169
  %v171 = vsub.f32 %v166, %v170
  %v172 = vmul.f32 %v171, 1.442695
  %v173 = vpow.pop %v172
  %v174 = vsel %vm167, %v173, 0.0
  %175 = vadd.xlane.f32.xlu0 %v174
  %v176 = vpop.xlane.xlu0 %175
  %v177 = vrcp.pop %v176
  %v178 = vmul.f32 %v173, %v177
  %v179 = vpack.c.bf16 %v178, %v178
  %v182 = vunpack.c.l.s4 1966171168
  %v183 = vunpack.c.0.s8 %v182
  %v184 = vlaneseq
  %v185 = vshrl.u32 %v184, 7
  %v186 = vsub.s32 %v183, %v185
  %v187 = vrot.slane %v179, %v186
  %v189 = vunpack.c.l.s4 1966171168
  %v190 = vunpack.c.0.s8 %v189
  %v191 = vlaneseq
  %v192 = vshrl.u32 %v191, 7
  %v193 = vsub.s32 %v190, %v192
  %v194 = vrot.slane %v187, %v193
  %v195 = vunpack.i.l.s16 %v194
  %v196 = vunpack.i.h.s16 %v194
  %v197 = vpack.i.b16 %v195, %v195
  %v198 = vlaneseq
  %v199 = vshrl.u32 %v198, 7
  %v200 = vsub.s32 0, %v199
  %v201 = vrot.slane %v197, %v200
  %vm202 = vcmask 64512
  %v204 = vsel %vm202, %v201, 0
  %vm206 = vcmask 1043456
  %v208 = vsel %vm206, %v38, 0
  %210 = vmatprep.subr.bf16.mxu0 0
  %211 = vmatpush1.bf16.msra.mxu0 0
  %212 = vmatprep.subr.bf16.mxu0 0
  %213 = vmatpush1.bf16.msra.mxu0 0
  %214 = vmatprep.subr.bf16.mxu0 0
  %215 = vmatpush1.bf16.msra.mxu0 0
  %216 = vmatprep.subr.bf16.mxu0 0
  %217 = vmatpush1.bf16.msra.mxu0 0
  %218 = vmatprep.subr.bf16.mxu0 0
  %219 = vmatpush1.bf16.msra.mxu0 0
  %220 = vmatprep.subr.bf16.mxu0 0
  %221 = vmatpush1.bf16.msra.mxu0 0
  %222 = vmatprep.subr.bf16.mxu0 0
  %223 = vmatpush1.bf16.msra.mxu0 0
  %224 = vmatprep.subr.bf16.mxu0 0
  %225 = vmatpush1.bf16.msra.mxu0 %v208
  %226 = vmatprep.subr.bf16.mxu0 0
  %227 = vmatpush2.bf16.msra.mxu0 0
  %228 = vmatprep.subr.bf16.mxu0 0
  %229 = vmatpush2.bf16.msra.mxu0 0
  %230 = vmatprep.subr.bf16.mxu0 0
  %231 = vmatpush2.bf16.msra.mxu0 0
  %232 = vmatprep.subr.bf16.mxu0 0
  %233 = vmatpush2.bf16.msra.mxu0 0
  %234 = vmatprep.subr.bf16.mxu0 0
  %235 = vmatpush2.bf16.msra.mxu0 0
  %236 = vmatprep.subr.bf16.mxu0 0
  %237 = vmatpush2.bf16.msra.mxu0 0
  %238 = vmatprep.subr.bf16.mxu0 0
  %239 = vmatpush2.bf16.msra.mxu0 0
  %240 = vmatprep.subr.bf16.mxu0 0
  %241 = vmatpush2.bf16.msra.mxu0 0
  %242 = vmatprep.mubr.bf16.mxu0 0
  %243 = vmatmul.mubr.bf16.gmra.mxu0 %v204
  %v244 = vpop.f32.mrf.mxu0
  %v245 = vadd.f32 0.0, %v244
  %v246 = vpop.f32.mrf.mxu0
  %v247 = vpop.f32.mrf.mxu0
  %v248 = vpop.f32.mrf.mxu0
  %249 = vdwg.mxu0
  %v250 = vpack.i.b16 %v196, %v196
  %v251 = vlaneseq
  %v252 = vshrl.u32 %v251, 7
  %v253 = vsub.s32 0, %v252
  %v254 = vrot.slane %v250, %v253
  %v256 = vsel %vm202, %v254, 0
  %v259 = vsel %vm206, %v39, 0
  %261 = vmatprep.subr.bf16.mxu0 0
  %262 = vmatpush1.bf16.msra.mxu0 0
  %263 = vmatprep.subr.bf16.mxu0 0
  %264 = vmatpush1.bf16.msra.mxu0 0
  %265 = vmatprep.subr.bf16.mxu0 0
  %266 = vmatpush1.bf16.msra.mxu0 0
  %267 = vmatprep.subr.bf16.mxu0 0
  %268 = vmatpush1.bf16.msra.mxu0 0
  %269 = vmatprep.subr.bf16.mxu0 0
  %270 = vmatpush1.bf16.msra.mxu0 0
  %271 = vmatprep.subr.bf16.mxu0 0
  %272 = vmatpush1.bf16.msra.mxu0 0
  %273 = vmatprep.subr.bf16.mxu0 0
  %274 = vmatpush1.bf16.msra.mxu0 0
  %275 = vmatprep.subr.bf16.mxu0 0
  %276 = vmatpush1.bf16.msra.mxu0 %v259
  %277 = vmatprep.subr.bf16.mxu0 0
  %278 = vmatpush2.bf16.msra.mxu0 0
  %279 = vmatprep.subr.bf16.mxu0 0
  %280 = vmatpush2.bf16.msra.mxu0 0
  %281 = vmatprep.subr.bf16.mxu0 0
  %282 = vmatpush2.bf16.msra.mxu0 0
  %283 = vmatprep.subr.bf16.mxu0 0
  %284 = vmatpush2.bf16.msra.mxu0 0
  %285 = vmatprep.subr.bf16.mxu0 0
  %286 = vmatpush2.bf16.msra.mxu0 0
  %287 = vmatprep.subr.bf16.mxu0 0
  %288 = vmatpush2.bf16.msra.mxu0 0
  %289 = vmatprep.subr.bf16.mxu0 0
  %290 = vmatpush2.bf16.msra.mxu0 0
  %291 = vmatprep.subr.bf16.mxu0 0
  %292 = vmatpush2.bf16.msra.mxu0 0
  %293 = vmatprep.mubr.bf16.mxu0 0
  %294 = vmatmul.mubr.bf16.gmra.mxu0 %v256
  %v295 = vpop.f32.mrf.mxu0
  %v296 = vadd.f32 0.0, %v295
  %v297 = vpop.f32.mrf.mxu0
  %v298 = vpop.f32.mrf.mxu0
  %v299 = vpop.f32.mrf.mxu0
  %300 = vdwg.mxu0
  %v301 = vpack.c.bf16 %v245, %v245
  %v302 = vpack.c.bf16 %v296, %v296
  %v303 = vld [vmem:[%s6] sm:$0xf]
  %v304 = vld [vmem:[%s6 + $0x4] sm:$0xf]
  %v305 = vld [vmem:[%s6 + $0x8] sm:$0xf]
  %v306 = vld [vmem:[%s6 + $0xc] sm:$0xf]
  %v307 = vld [vmem:[%s7] sm:$0x1]
  %v309 = vlaneseq
  %v310 = vshrl.u32 %v309, 7
  %v311 = vsub.s32 0, %v310
  %v312 = vrot.slane %v307, %v311
  %v316 = vunpack.c.l.b16 %v301
  %v317 = vunpack.c.l.b16 %v302
  %v318 = vrot.slane %v317, 7
  %v319 = vsel %vm163, %v318, %v316
  %v320 = vpack.c.b16 %v319, %v319
  %v325 = vunpack.c.l.b16 %v303
  %v326 = vunpack.c.l.b16 %v304
  %v327 = vunpack.c.l.b16 %v305
  %v328 = vunpack.c.l.b16 %v306
  %v329 = vpack.c.b16 %v326, %v325
  %v330 = vpack.c.b16 %v328, %v327
  %v334 = vsel %vm68, %v320, 0
  %336 = vmatprep.subr.bf16.mxu0 0
  %337 = vmatpush1.bf16.msra.mxu0 0
  %338 = vmatprep.subr.bf16.mxu0 0
  %339 = vmatpush1.bf16.msra.mxu0 0
  %340 = vmatprep.subr.bf16.mxu0 0
  %341 = vmatpush1.bf16.msra.mxu0 0
  %342 = vmatprep.subr.bf16.mxu0 0
  %343 = vmatpush1.bf16.msra.mxu0 0
  %344 = vmatprep.subr.bf16.mxu0 0
  %345 = vmatpush1.bf16.msra.mxu0 0
  %346 = vmatprep.subr.bf16.mxu0 0
  %347 = vmatpush1.bf16.msra.mxu0 0
  %348 = vmatprep.subr.bf16.mxu0 0
  %349 = vmatpush1.bf16.msra.mxu0 %v330
  %350 = vmatprep.subr.bf16.mxu0 0
  %351 = vmatpush1.bf16.msra.mxu0 %v329
  %352 = vmatprep.subr.bf16.mxu0 0
  %353 = vmatpush2.bf16.msra.mxu0 0
  %354 = vmatprep.subr.bf16.mxu0 0
  %355 = vmatpush2.bf16.msra.mxu0 0
  %356 = vmatprep.subr.bf16.mxu0 0
  %357 = vmatpush2.bf16.msra.mxu0 0
  %358 = vmatprep.subr.bf16.mxu0 0
  %359 = vmatpush2.bf16.msra.mxu0 0
  %360 = vmatprep.subr.bf16.mxu0 0
  %361 = vmatpush2.bf16.msra.mxu0 0
  %362 = vmatprep.subr.bf16.mxu0 0
  %363 = vmatpush2.bf16.msra.mxu0 0
  %364 = vmatprep.subr.bf16.mxu0 0
  %365 = vmatpush2.bf16.msra.mxu0 0
  %366 = vmatprep.subr.bf16.mxu0 0
  %367 = vmatpush2.bf16.msra.mxu0 0
  %368 = vmatprep.mubr.bf16.mxu0 0
  %369 = vmatmul.mubr.bf16.gmra.mxu0 %v334
  %v370 = vpop.f32.mrf.mxu0
  %v371 = vadd.f32 %v312, %v370
  %v372 = vpop.f32.mrf.mxu0
  %v373 = vpop.f32.mrf.mxu0
  %v374 = vpop.f32.mrf.mxu0
  %375 = vdwg.mxu0
  %v376 = vmax.f32 %v371, 0.0
  %v377 = vld [vmem:[%s8] sm:$0xff]
  %v378 = vld [vmem:[%s8 + $0x8] sm:$0xff]
  %v379 = vld [vmem:[%s8 + $0x10] sm:$0xff]
  %v380 = vld [vmem:[%s8 + $0x18] sm:$0xff]
  %v381 = vld [vmem:[%s9] sm:$0x1]
  %v383 = vlaneseq
  %v384 = vshrl.u32 %v383, 7
  %v385 = vsub.s32 0, %v384
  %v386 = vrot.slane %v381, %v385
  %v389 = vsel %vm68, %v376, 0
  %391 = vmatprep.subr.mxu0 0.0
  %392 = vmatpush1.msra.mxu0 0.0
  %393 = vmatprep.subr.mxu0 0.0
  %394 = vmatpush1.msra.mxu0 0.0
  %395 = vmatprep.subr.mxu0 0.0
  %396 = vmatpush1.msra.mxu0 0.0
  %397 = vmatprep.subr.mxu0 0.0
  %398 = vmatpush1.msra.mxu0 0.0
  %399 = vmatprep.subr.mxu0 0.0
  %400 = vmatpush1.msra.mxu0 0.0
  %401 = vmatprep.subr.mxu0 0.0
  %402 = vmatpush1.msra.mxu0 0.0
  %403 = vmatprep.subr.mxu0 0.0
  %404 = vmatpush1.msra.mxu0 0.0
  %405 = vmatprep.subr.mxu0 0.0
  %406 = vmatpush1.msra.mxu0 0.0
  %407 = vmatprep.subr.mxu0 0.0
  %408 = vmatpush1.msra.mxu0 0.0
  %409 = vmatprep.subr.mxu0 0.0
  %410 = vmatpush1.msra.mxu0 0.0
  %411 = vmatprep.subr.mxu0 0.0
  %412 = vmatpush1.msra.mxu0 0.0
  %413 = vmatprep.subr.mxu0 0.0
  %414 = vmatpush1.msra.mxu0 0.0
  %415 = vmatprep.subr.mxu0 0.0
  %416 = vmatpush1.msra.mxu0 %v380
  %417 = vmatprep.subr.mxu0 0.0
  %418 = vmatpush1.msra.mxu0 %v379
  %419 = vmatprep.subr.mxu0 0.0
  %420 = vmatpush1.msra.mxu0 %v378
  %421 = vmatprep.subr.mxu0 0.0
  %422 = vmatpush1.msra.mxu0 %v377
  %423 = vmatprep.subr.mxu0 0.0
  %424 = vmatpush2.msra.mxu0 0.0
  %425 = vmatprep.subr.mxu0 0.0
  %426 = vmatpush2.msra.mxu0 0.0
  %427 = vmatprep.subr.mxu0 0.0
  %428 = vmatpush2.msra.mxu0 0.0
  %429 = vmatprep.subr.mxu0 0.0
  %430 = vmatpush2.msra.mxu0 0.0
  %431 = vmatprep.subr.mxu0 0.0
  %432 = vmatpush2.msra.mxu0 0.0
  %433 = vmatprep.subr.mxu0 0.0
  %434 = vmatpush2.msra.mxu0 0.0
  %435 = vmatprep.subr.mxu0 0.0
  %436 = vmatpush2.msra.mxu0 0.0
  %437 = vmatprep.subr.mxu0 0.0
  %438 = vmatpush2.msra.mxu0 0.0
  %439 = vmatprep.subr.mxu0 0.0
  %440 = vmatpush2.msra.mxu0 0.0
  %441 = vmatprep.subr.mxu0 0.0
  %442 = vmatpush2.msra.mxu0 0.0
  %443 = vmatprep.subr.mxu0 0.0
  %444 = vmatpush2.msra.mxu0 0.0
  %445 = vmatprep.subr.mxu0 0.0
  %446 = vmatpush2.msra.mxu0 0.0
  %447 = vmatprep.subr.mxu0 0.0
  %448 = vmatpush2.msra.mxu0 0.0
  %449 = vmatprep.subr.mxu0 0.0
  %450 = vmatpush2.msra.mxu0 0.0
  %451 = vmatprep.subr.mxu0 0.0
  %452 = vmatpush2.msra.mxu0 0.0
  %453 = vmatprep.subr.mxu0 0.0
  %454 = vmatpush2.msra.mxu0 0.0
  %455 = vmatprep.mubr.f32.mxu0 0.0
  %456 = vmatmul.mubr.f32.gmra.mxu0 %v389
  %v457 = vpop.f32.mrf.mxu0
  %v458 = vadd.f32 %v386, %v457
  %v459 = vpop.f32.mrf.mxu0
  %460 = vdwg.mxu0
  %461 = vst [vmem:[%s10] sm:$0x3] 0.0
  %vm462 = vcmask 74752
  %463 = vst.msk [vmem:[%s10] sm:$0x3] %vm462, %v458
  %v464 = vxor.u32 %v458, 2147483648
  %v465 = vmul.f32 %v464, 1.442695
  %v466 = vpow.pop %v465
  %v467 = vadd.f32 %v466, 1.0
  %v468 = vrcp.pop %v467
  %v469 = vmul.f32 1.0, %v468
  %vm470 = vcmask 83024
  %471 = vst.msk [vmem:[%s10] sm:$0x3] %vm470, %v469
  %473 = vrot.lane.b32.xlu0 %v178, 11
  %v474 = vpop.permute.xlu0 %473
  %vm476 = vcmask 148568
  %477 = vst.msk [vmem:[%s10] sm:$0x3] %vm476, %v474
  // Predicated region
  $region42: #{decoder_forward.1} parent=0 // pred_check
    _
  $region43: #{decoder_forward.1} parent=0 // pred_check_branch
    %479 = sbr.rel (0) target = $region45
  $region44: #{decoder_forward.1} parent=0 // pred_region
    _
  $region45: #{decoder_forward.1} parent=0 // pred_fallthru
    _
  // Predicated region
  $region46: #{decoder_forward.1} parent=0 // pred_check
    _
  $region47: #{decoder_forward.1} parent=0 // pred_check_branch
    %481 = sbr.rel (0) target = $region49
  $region48: #{decoder_forward.1} parent=0 // pred_region
    _
  $region49: #{decoder_forward.1} parent=0 // pred_fallthru
    _

</llo_original>
